<compile_context>
chip_gen: v5e
topology: v5e:2x2
jax: 0.10.0
libtpu: 0.0.40
codegen_flags: <defaults>
</compile_context>

<pallas_src>
import jax
import jax.numpy as jnp
from jax.experimental import pallas as pl
from jax.experimental.pallas import tpu as pltpu


# Contract the 16-feature axes of w3 (1,16) and h2 (TB,16) -> (1, TB)  (i.e. w3 @ h2^T).
_FC3_DIMS = (((1,), (1,)), ((), ()))


def critic_kernel(x_ref, w1_ref, b1_ref, w2_ref, b2_ref, w3_ref, b3_ref, o_ref):
    x = x_ref[...]                                                    # (TB, 32)

    # fc1 + ReLU  (MXU, f32 accumulation)
    h1 = jnp.dot(x, w1_ref[...], preferred_element_type=jnp.float32) + b1_ref[...]
    h1 = jnp.maximum(h1, 0.0).astype(x.dtype)                         # back to streaming dtype

    # fc2 + ReLU
    h2 = jnp.dot(h1, w2_ref[...], preferred_element_type=jnp.float32) + b2_ref[...]
    h2 = jnp.maximum(h2, 0.0)                                         # f32 elementwise (v5e-safe)

    # fc3 (16 -> 1) as w3 @ h2^T so the per-row results land lane-dense as (1, TB).
    y_row = jax.lax.dot_general(w3_ref[...], h2, _FC3_DIMS,
                                preferred_element_type=jnp.float32)   # (1, TB)
    o_ref[...] = (y_row + b3_ref[...]).astype(o_ref.dtype)


def _round_up(x, m):
    return ((x + m - 1) // m) * m


def critic_forward(state, params, *, block_rows=2048, compute_dtype=None):
    """Fused Critic forward: state (B, 32) -> value (B, 1) float32."""
    w1, b1, w2, b2, w3, b3 = params
    if compute_dtype is not None:
        # Optional bandwidth optimization (v6e/v7x): stream activations and the two big
        # weight matrices in bf16; accumulation stays f32 inside the kernel.
        state = state.astype(compute_dtype)
        w1 = w1.astype(compute_dtype)
        w2 = w2.astype(compute_dtype)

    B, F = state.shape  # F == 32

    # Tile size: multiple of 128 (lane-dense (1, TB) output, sublane-aligned input),
    # capped so the double-buffered per-step working set stays tiny vs. VMEM.
    tb = min(int(block_rows), _round_up(B, 128))
    b_pad = _round_up(B, tb)
    if b_pad != B:
        state = jnp.pad(state, ((0, b_pad - B), (0, 0)))              # zero-pad ragged tail
    nb = b_pad // tb

    out_row = pl.pallas_call(
        critic_kernel,
        out_shape=jax.ShapeDtypeStruct((1, b_pad), jnp.float32),
        grid_spec=pltpu.PrefetchScalarGridSpec(
            num_scalar_prefetch=0,
            grid=(nb,),
            in_specs=[
                pl.BlockSpec((tb, F), lambda i: (i, 0)),      # batch-tiled activations
                pl.BlockSpec(w1.shape, lambda i: (0, 0)),     # weights/biases: resident
                pl.BlockSpec(b1.shape, lambda i: (0, 0)),
                pl.BlockSpec(w2.shape, lambda i: (0, 0)),
                pl.BlockSpec(b2.shape, lambda i: (0, 0)),
                pl.BlockSpec(w3.shape, lambda i: (0, 0)),
                pl.BlockSpec(b3.shape, lambda i: (0, 0)),
            ],
            out_specs=pl.BlockSpec((1, tb), lambda i: (0, i)),
        ),
        compiler_params=pltpu.CompilerParams(
            dimension_semantics=("parallel",),                # megacore split on v7x
        ),
    )(state, w1, b1, w2, b2, w3, b3)

    return out_row[0, :B].reshape(B, 1)


def init_params(key):
    """PyTorch nn.Linear-style init (U[-1/sqrt(fan_in), +1/sqrt(fan_in)]).
    w1/w2 stored as (in, out) so the kernel computes x @ W; w3 kept in PyTorch
    (out=1, in=16) row form for the trans-B fc3; biases are (1, out)."""
    def linear(k, fan_in, fan_out):
        kw, kb = jax.random.split(k)
        bound = 1.0 / jnp.sqrt(float(fan_in))
        w = jax.random.uniform(kw, (fan_in, fan_out), jnp.float32, -bound, bound)
        b = jax.random.uniform(kb, (1, fan_out), jnp.float32, -bound, bound)
        return w, b

    k1, k2, k3 = jax.random.split(key, 3)
    w1, b1 = linear(k1, 32, 32)
    w2, b2 = linear(k2, 32, 16)
    w3t, b3 = linear(k3, 16, 1)    # (16, 1)
    w3 = w3t.T                     # (1, 16) row, i.e. PyTorch fc3.weight layout
    return (w1, b1, w2, b2, w3, b3)


def critic_ref(state, params):
    """Plain-JAX reference (matches the PyTorch module's forward)."""
    w1, b1, w2, b2, w3, b3 = params
    x = jnp.maximum(state @ w1 + b1, 0.0)
    x = jnp.maximum(x @ w2 + b2, 0.0)
    return x @ w3.T + b3


if __name__ == "__main__":
    key = jax.random.PRNGKey(0)
    key, kx = jax.random.split(key)
    params = init_params(key)

    # Small batch (8 states of 8*4=32 features), matches the module's expected input.
    B = 8
    state = jax.random.normal(kx, (B, 32), jnp.float32)
    out = jax.block_until_ready(critic_forward(state, params))
    ref = critic_ref(state, params)
    assert out.shape == (B, 1)
    assert jnp.allclose(out, ref, atol=1e-4, rtol=1e-4)

    # Larger, ragged batch exercising a multi-step parallel grid (tail padding path).
    key, kx2 = jax.random.split(key)
    B2 = 300
    state2 = jax.random.normal(kx2, (B2, 32), jnp.float32)
    out2 = jax.block_until_ready(critic_forward(state2, params, block_rows=128))
    ref2 = critic_ref(state2, params)
    assert out2.shape == (B2, 1)
    assert jnp.allclose(out2, ref2, atol=1e-4, rtol=1e-4)

    # Optional bf16-streaming path (v6e/v7x bandwidth win), f32 accumulation.
    out_bf16 = jax.block_until_ready(
        critic_forward(state2, params, compute_dtype=jnp.bfloat16))
    assert jnp.allclose(out_bf16, ref2, atol=5e-2, rtol=5e-2)

    print("KERNEL_OK")
</pallas_src>

<mosaic_0001>
module attributes {stable_mosaic.version = 11 : i64} {
  func.func @critic_kernel(%arg0: i32, %arg1: memref<128x32xf32, #tpu.memory_space<vmem>>, %arg2: memref<32x32xf32, #tpu.memory_space<vmem>>, %arg3: memref<1x32xf32, #tpu.memory_space<vmem>>, %arg4: memref<32x16xf32, #tpu.memory_space<vmem>>, %arg5: memref<1x16xf32, #tpu.memory_space<vmem>>, %arg6: memref<1x16xf32, #tpu.memory_space<vmem>>, %arg7: memref<1x1xf32, #tpu.memory_space<vmem>>, %arg8: memref<1x128xf32, #tpu.memory_space<vmem>>) attributes {dimension_semantics = [#tpu.dimension_semantics<parallel>], iteration_bounds = array<i64: 1>, scalar_prefetch = 0 : i64, scratch_operands = 0 : i64, tpu.core_type = #tpu.core_type<tc>, window_params = [{transform_indices = @transform_0, window_bounds = array<i64: 128, 32>}, {pipeline_mode = #tpu.pipeline_mode<synchronous>, transform_indices = @transform_1, window_bounds = array<i64: 32, 32>}, {pipeline_mode = #tpu.pipeline_mode<synchronous>, transform_indices = @transform_2, window_bounds = array<i64: 1, 32>}, {pipeline_mode = #tpu.pipeline_mode<synchronous>, transform_indices = @transform_3, window_bounds = array<i64: 32, 16>}, {pipeline_mode = #tpu.pipeline_mode<synchronous>, transform_indices = @transform_4, window_bounds = array<i64: 1, 16>}, {pipeline_mode = #tpu.pipeline_mode<synchronous>, transform_indices = @transform_5, window_bounds = array<i64: 1, 16>}, {pipeline_mode = #tpu.pipeline_mode<synchronous>, transform_indices = @transform_6, window_bounds = array<i64: 1, 1>}, {transform_indices = @transform_7, window_bounds = array<i64: 1, 128>}]} {
    %c0 = arith.constant 0 : index
    %c0_0 = arith.constant 0 : index
    %0 = vector.load %arg1[%c0, %c0_0] : memref<128x32xf32, #tpu.memory_space<vmem>>, vector<128x32xf32>
    %c0_1 = arith.constant 0 : index
    %c0_2 = arith.constant 0 : index
    %1 = vector.load %arg2[%c0_1, %c0_2] : memref<32x32xf32, #tpu.memory_space<vmem>>, vector<32x32xf32>
    %cst = arith.constant dense<0.000000e+00> : vector<128x32xf32>
    %2 = tpu.matmul %0, %1, %cst {dimension_numbers = #tpu.dot_dimension_numbers<[1], [0], [0], [1], [0, 0, 1, 1], [], []>} : vector<128x32xf32>, vector<32x32xf32>, vector<128x32xf32> -> vector<128x32xf32>
    %c0_3 = arith.constant 0 : index
    %c0_4 = arith.constant 0 : index
    %3 = vector.load %arg3[%c0_3, %c0_4] : memref<1x32xf32, #tpu.memory_space<vmem>>, vector<1x32xf32>
    %4 = vector.broadcast %3 : vector<1x32xf32> to vector<128x32xf32>
    %5 = arith.addf %2, %4 : vector<128x32xf32>
    %cst_5 = arith.constant 0.000000e+00 : f32
    %6 = vector.broadcast %cst_5 : f32 to vector<128x32xf32>
    %7 = arith.maximumf %5, %6 : vector<128x32xf32>
    %c0_6 = arith.constant 0 : index
    %c0_7 = arith.constant 0 : index
    %8 = vector.load %arg4[%c0_6, %c0_7] : memref<32x16xf32, #tpu.memory_space<vmem>>, vector<32x16xf32>
    %cst_8 = arith.constant dense<0.000000e+00> : vector<128x16xf32>
    %9 = tpu.matmul %7, %8, %cst_8 {dimension_numbers = #tpu.dot_dimension_numbers<[1], [0], [0], [1], [0, 0, 1, 1], [], []>} : vector<128x32xf32>, vector<32x16xf32>, vector<128x16xf32> -> vector<128x16xf32>
    %c0_9 = arith.constant 0 : index
    %c0_10 = arith.constant 0 : index
    %10 = vector.load %arg5[%c0_9, %c0_10] : memref<1x16xf32, #tpu.memory_space<vmem>>, vector<1x16xf32>
    %11 = vector.broadcast %10 : vector<1x16xf32> to vector<128x16xf32>
    %12 = arith.addf %9, %11 : vector<128x16xf32>
    %cst_11 = arith.constant 0.000000e+00 : f32
    %13 = vector.broadcast %cst_11 : f32 to vector<128x16xf32>
    %14 = arith.maximumf %12, %13 : vector<128x16xf32>
    %c0_12 = arith.constant 0 : index
    %c0_13 = arith.constant 0 : index
    %15 = vector.load %arg6[%c0_12, %c0_13] : memref<1x16xf32, #tpu.memory_space<vmem>>, vector<1x16xf32>
    %cst_14 = arith.constant dense<0.000000e+00> : vector<1x128xf32>
    %16 = tpu.matmul %15, %14, %cst_14 {dimension_numbers = #tpu.dot_dimension_numbers<[1], [1], [0], [0], [0, 0, 1, 0], [], []>} : vector<1x16xf32>, vector<128x16xf32>, vector<1x128xf32> -> vector<1x128xf32>
    %c0_15 = arith.constant 0 : index
    %c0_16 = arith.constant 0 : index
    %17 = vector.load %arg7[%c0_15, %c0_16] : memref<1x1xf32, #tpu.memory_space<vmem>>, vector<1x1xf32>
    %18 = vector.broadcast %17 : vector<1x1xf32> to vector<1x128xf32>
    %19 = arith.addf %16, %18 : vector<1x128xf32>
    %c0_17 = arith.constant 0 : index
    %c0_18 = arith.constant 0 : index
    %20 = vector.load %arg8[%c0_17, %c0_18] : memref<1x128xf32, #tpu.memory_space<vmem>>, vector<1x128xf32>
    tpu.vector_store %arg8[%c0_17, %c0_18], %19 {strides = array<i32>} : memref<1x128xf32, #tpu.memory_space<vmem>>, vector<1x128xf32>,
    return
  }
  func.func @transform_0(%arg0: i32) -> (i32, i32) {
    %c0_i32 = arith.constant 0 : i32
    %c0_i32_0 = arith.constant 0 : i32
    return %arg0, %c0_i32 : i32, i32
  }
  func.func @transform_1(%arg0: i32) -> (i32, i32) {
    %c0_i32 = arith.constant 0 : i32
    %c0_i32_0 = arith.constant 0 : i32
    %c0_i32_1 = arith.constant 0 : i32
    return %c0_i32, %c0_i32_0 : i32, i32
  }
  func.func @transform_2(%arg0: i32) -> (i32, i32) {
    %c0_i32 = arith.constant 0 : i32
    %c0_i32_0 = arith.constant 0 : i32
    %c0_i32_1 = arith.constant 0 : i32
    return %c0_i32, %c0_i32_0 : i32, i32
  }
  func.func @transform_3(%arg0: i32) -> (i32, i32) {
    %c0_i32 = arith.constant 0 : i32
    %c0_i32_0 = arith.constant 0 : i32
    %c0_i32_1 = arith.constant 0 : i32
    return %c0_i32, %c0_i32_0 : i32, i32
  }
  func.func @transform_4(%arg0: i32) -> (i32, i32) {
    %c0_i32 = arith.constant 0 : i32
    %c0_i32_0 = arith.constant 0 : i32
    %c0_i32_1 = arith.constant 0 : i32
    return %c0_i32, %c0_i32_0 : i32, i32
  }
  func.func @transform_5(%arg0: i32) -> (i32, i32) {
    %c0_i32 = arith.constant 0 : i32
    %c0_i32_0 = arith.constant 0 : i32
    %c0_i32_1 = arith.constant 0 : i32
    return %c0_i32, %c0_i32_0 : i32, i32
  }
  func.func @transform_6(%arg0: i32) -> (i32, i32) {
    %c0_i32 = arith.constant 0 : i32
    %c0_i32_0 = arith.constant 0 : i32
    %c0_i32_1 = arith.constant 0 : i32
    return %c0_i32, %c0_i32_0 : i32, i32
  }
  func.func @transform_7(%arg0: i32) -> (i32, i32) {
    %c0_i32 = arith.constant 0 : i32
    %c0_i32_0 = arith.constant 0 : i32
    return %c0_i32, %arg0 : i32, i32
  }
}

</mosaic_0001>

<llo_original>
// kernel: tpu_custom_call.1
$region0: #{tpu_custom_call.1}
  #allocation0 [shape = 'u32[]', space=smem, size = 0x4, offset = 0x4, fixed_abs, tag = 'smem constant byte address 0x4 - core index']
  #allocation1 [shape = 'u32[72,128]{1,0:T(1,128)}', space=vmem, size = 0x9000, scoped, tag = 'internal scratch']
  #allocation2 [shape = 'f32[1,1]{1,0:T(1,128)S(1)}', space=vmem, size = 0x200, scoped, tag = 'scoped memory for tpu_custom_call.1']
  %s0 = inlined_call_operand.vmem [shape: f32[128,32], index: 0, kind: input, shape index: {}]
  %s1 = inlined_call_operand.vmem [shape: f32[32,32], index: 1, kind: input, shape index: {}]
  %s2 = inlined_call_operand.vmem [shape: f32[1,32], index: 2, kind: input, shape index: {}]
  %s3 = inlined_call_operand.vmem [shape: f32[32,16], index: 3, kind: input, shape index: {}]
  %s4 = inlined_call_operand.vmem [shape: f32[1,16], index: 4, kind: input, shape index: {}]
  %s5 = inlined_call_operand.vmem [shape: f32[1,16], index: 5, kind: input, shape index: {}]
  %s6 = inlined_call_operand.<no memory space> [shape: f32[1,1], index: 6, kind: input, shape index: {}]
  %s7 = inlined_call_operand.hbm [shape: f32[1,128], index: 7, kind: output, shape index: {}]
  %s8 = sld [smem:[#allocation0]]
  $region38: #{tpu_custom_call.1} parent=0
    _
  %s10 = ssub.s32 1, %s8
  %s11 = scalar_select 0, %s10, %s8
  %v12 = vstv %s6
  %13 = vst [vmem:[#allocation2] sm:$0x1] %v12
  $region1: #{tpu_custom_call.1} parent=0
    #allocation3 [shape = 'u8[512]{0}', space=vmem, size = 0x400, scoped, tag = 'output window, operand 0, single buffered']
    #allocation4 [shape = 's32[1]{0}', space=sflag, size = 0x4, scoped, tag = 'scoped memory for tpu_custom_call.1']
    %14 = vsyncpa [#allocation4], 0
    // Predicated region
    $region2: #{tpu_custom_call.1} parent=1 // pred_check
      _
    $region3: #{tpu_custom_call.1} parent=1 // pred_check_branch
      %16 = sbr.rel (0) target = $region5
    $region4: #{tpu_custom_call.1} parent=1 // pred_region
      _
    $region5: #{tpu_custom_call.1} parent=1 // pred_fallthru
      _
    // Predicated region
    $region6: #{tpu_custom_call.1} parent=1 // pred_check
      _
    $region7: #{tpu_custom_call.1} parent=1 // pred_check_branch
      %18 = sbr.rel (0) target = $region9
    $region8: #{tpu_custom_call.1} parent=1 // pred_region
      _
    $region9: #{tpu_custom_call.1} parent=1 // pred_fallthru
      _
    // Predicated region
    $region10: #{tpu_custom_call.1} parent=1 // pred_check
      _
    $region11: #{tpu_custom_call.1} parent=1 // pred_check_branch
      %20 = sbr.rel (0) target = $region13
    $region12: #{tpu_custom_call.1} parent=1 // pred_region
      _
    $region13: #{tpu_custom_call.1} parent=1 // pred_fallthru
      _
    // Predicated region
    $region14: #{tpu_custom_call.1} parent=1 // pred_check
      _
    $region15: #{tpu_custom_call.1} parent=1 // pred_check_branch
      %22 = sbr.rel (0) target = $region17
    $region16: #{tpu_custom_call.1} parent=1 // pred_region
      _
    $region17: #{tpu_custom_call.1} parent=1 // pred_fallthru
      _
    // Predicated region
    $region18: #{tpu_custom_call.1} parent=1 // pred_check
      _
    $region19: #{tpu_custom_call.1} parent=1 // pred_check_branch
      %24 = sbr.rel (0) target = $region21
    $region20: #{tpu_custom_call.1} parent=1 // pred_region
      _
    $region21: #{tpu_custom_call.1} parent=1 // pred_fallthru
      _
    // Predicated region
    $region22: #{tpu_custom_call.1} parent=1 // pred_check
      _
    $region23: #{tpu_custom_call.1} parent=1 // pred_check_branch
      %26 = sbr.rel (0) target = $region25
    $region24: #{tpu_custom_call.1} parent=1 // pred_region
      _
    $region25: #{tpu_custom_call.1} parent=1 // pred_fallthru
      _
    // Predicated region
    $region26: #{tpu_custom_call.1} parent=1 // pred_check
      _
    $region27: #{tpu_custom_call.1} parent=1 // pred_check_branch
      %28 = sbr.rel (0) target = $region29
    $region28: #{tpu_custom_call.1} parent=1 // pred_region
      _
    $region29: #{tpu_custom_call.1} parent=1 // pred_fallthru
      _
    %v29 = vld [vmem:[%s0] sm:$0xff]
    %v30 = vld [vmem:[%s0 + $0x8] sm:$0xff]
    %v31 = vld [vmem:[%s0 + $0x10] sm:$0xff]
    %v32 = vld [vmem:[%s0 + $0x18] sm:$0xff]
    %v33 = vld [vmem:[%s0 + $0x20] sm:$0xff]
    %v34 = vld [vmem:[%s0 + $0x28] sm:$0xff]
    %v35 = vld [vmem:[%s0 + $0x30] sm:$0xff]
    %v36 = vld [vmem:[%s0 + $0x38] sm:$0xff]
    %v37 = vld [vmem:[%s0 + $0x40] sm:$0xff]
    %v38 = vld [vmem:[%s0 + $0x48] sm:$0xff]
    %v39 = vld [vmem:[%s0 + $0x50] sm:$0xff]
    %v40 = vld [vmem:[%s0 + $0x58] sm:$0xff]
    %v41 = vld [vmem:[%s0 + $0x60] sm:$0xff]
    %v42 = vld [vmem:[%s0 + $0x68] sm:$0xff]
    %v43 = vld [vmem:[%s0 + $0x70] sm:$0xff]
    %v44 = vld [vmem:[%s0 + $0x78] sm:$0xff]
    %v45 = vld [vmem:[%s1] sm:$0xff]
    %v46 = vld [vmem:[%s1 + $0x8] sm:$0xff]
    %v47 = vld [vmem:[%s1 + $0x10] sm:$0xff]
    %v48 = vld [vmem:[%s1 + $0x18] sm:$0xff]
    %v49 = vld [vmem:[%s2] sm:$0x1]
    %v51 = vperm.slane %v49, 0
    %vm53 = vcmask 261120
    %v55 = vsel %vm53, %v29, 0
    %v58 = vsel %vm53, %v30, 0
    %v61 = vsel %vm53, %v31, 0
    %v64 = vsel %vm53, %v32, 0
    %v67 = vsel %vm53, %v33, 0
    %v70 = vsel %vm53, %v34, 0
    %v73 = vsel %vm53, %v35, 0
    %v76 = vsel %vm53, %v36, 0
    %v79 = vsel %vm53, %v37, 0
    %v82 = vsel %vm53, %v38, 0
    %v85 = vsel %vm53, %v39, 0
    %v88 = vsel %vm53, %v40, 0
    %v91 = vsel %vm53, %v41, 0
    %v94 = vsel %vm53, %v42, 0
    %v97 = vsel %vm53, %v43, 0
    %v100 = vsel %vm53, %v44, 0
    %102 = vmatpush.msra.mxu0 0.0
    %103 = vmatpush.msra.mxu0 0.0
    %104 = vmatpush.msra.mxu0 0.0
    %105 = vmatpush.msra.mxu0 0.0
    %106 = vmatpush.msra.mxu0 0.0
    %107 = vmatpush.msra.mxu0 0.0
    %108 = vmatpush.msra.mxu0 0.0
    %109 = vmatpush.msra.mxu0 0.0
    %110 = vmatpush.msra.mxu0 0.0
    %111 = vmatpush.msra.mxu0 0.0
    %112 = vmatpush.msra.mxu0 0.0
    %113 = vmatpush.msra.mxu0 0.0
    %114 = vmatpush.msra.mxu0 %v48
    %115 = vmatpush.msra.mxu0 %v47
    %116 = vmatpush.msra.mxu0 %v46
    %117 = vmatpush.msra.mxu0 %v45
    %118 = vmatmul.f32.gmra.mxu0 %v55
    %v119 = vpop.f32.mrf.mxu0
    %v120 = vadd.f32 %v51, %v119
    %121 = vmatmul.f32.gmra.mxu0 %v58
    %v122 = vpop.f32.mrf.mxu0
    %v123 = vadd.f32 %v51, %v122
    %124 = vmatmul.f32.gmra.mxu0 %v61
    %v125 = vpop.f32.mrf.mxu0
    %v126 = vadd.f32 %v51, %v125
    %127 = vmatmul.f32.gmra.mxu0 %v64
    %v128 = vpop.f32.mrf.mxu0
    %v129 = vadd.f32 %v51, %v128
    %130 = vmatmul.f32.gmra.mxu0 %v67
    %v131 = vpop.f32.mrf.mxu0
    %v132 = vadd.f32 %v51, %v131
    %133 = vmatmul.f32.gmra.mxu0 %v70
    %v134 = vpop.f32.mrf.mxu0
    %v135 = vadd.f32 %v51, %v134
    %136 = vmatmul.f32.gmra.mxu0 %v73
    %v137 = vpop.f32.mrf.mxu0
    %v138 = vadd.f32 %v51, %v137
    %139 = vmatmul.f32.gmra.mxu0 %v76
    %v140 = vpop.f32.mrf.mxu0
    %v141 = vadd.f32 %v51, %v140
    %142 = vmatmul.f32.gmra.mxu0 %v79
    %v143 = vpop.f32.mrf.mxu0
    %v144 = vadd.f32 %v51, %v143
    %145 = vmatmul.f32.gmra.mxu0 %v82
    %v146 = vpop.f32.mrf.mxu0
    %v147 = vadd.f32 %v51, %v146
    %148 = vmatmul.f32.gmra.mxu0 %v85
    %v149 = vpop.f32.mrf.mxu0
    %v150 = vadd.f32 %v51, %v149
    %151 = vmatmul.f32.gmra.mxu0 %v88
    %v152 = vpop.f32.mrf.mxu0
    %v153 = vadd.f32 %v51, %v152
    %154 = vmatmul.f32.gmra.mxu0 %v91
    %v155 = vpop.f32.mrf.mxu0
    %v156 = vadd.f32 %v51, %v155
    %157 = vmatmul.f32.gmra.mxu0 %v94
    %v158 = vpop.f32.mrf.mxu0
    %v159 = vadd.f32 %v51, %v158
    %160 = vmatmul.f32.gmra.mxu0 %v97
    %v161 = vpop.f32.mrf.mxu0
    %v162 = vadd.f32 %v51, %v161
    %163 = vmatmul.f32.gmra.mxu0 %v100
    %v164 = vpop.f32.mrf.mxu0
    %v165 = vadd.f32 %v51, %v164
    %166 = vdwg.mxu0
    %v167 = vmax.f32 %v120, 0.0
    %v168 = vmax.f32 %v123, 0.0
    %v169 = vmax.f32 %v126, 0.0
    %v170 = vmax.f32 %v129, 0.0
    %v171 = vmax.f32 %v132, 0.0
    %v172 = vmax.f32 %v135, 0.0
    %v173 = vmax.f32 %v138, 0.0
    %v174 = vmax.f32 %v141, 0.0
    %v175 = vmax.f32 %v144, 0.0
    %v176 = vmax.f32 %v147, 0.0
    %v177 = vmax.f32 %v150, 0.0
    %v178 = vmax.f32 %v153, 0.0
    %v179 = vmax.f32 %v156, 0.0
    %v180 = vmax.f32 %v159, 0.0
    %v181 = vmax.f32 %v162, 0.0
    %v182 = vmax.f32 %v165, 0.0
    %v183 = vld [vmem:[%s3] sm:$0xff]
    %v184 = vld [vmem:[%s3 + $0x8] sm:$0xff]
    %v185 = vld [vmem:[%s3 + $0x10] sm:$0xff]
    %v186 = vld [vmem:[%s3 + $0x18] sm:$0xff]
    %v187 = vld [vmem:[%s4] sm:$0x1]
    %v189 = vperm.slane %v187, 0
    %v192 = vsel %vm53, %v167, 0
    %v195 = vsel %vm53, %v168, 0
    %v198 = vsel %vm53, %v169, 0
    %v201 = vsel %vm53, %v170, 0
    %v204 = vsel %vm53, %v171, 0
    %v207 = vsel %vm53, %v172, 0
    %v210 = vsel %vm53, %v173, 0
    %v213 = vsel %vm53, %v174, 0
    %v216 = vsel %vm53, %v175, 0
    %v219 = vsel %vm53, %v176, 0
    %v222 = vsel %vm53, %v177, 0
    %v225 = vsel %vm53, %v178, 0
    %v228 = vsel %vm53, %v179, 0
    %v231 = vsel %vm53, %v180, 0
    %v234 = vsel %vm53, %v181, 0
    %v237 = vsel %vm53, %v182, 0
    %239 = vmatpush.msra.mxu0 0.0
    %240 = vmatpush.msra.mxu0 0.0
    %241 = vmatpush.msra.mxu0 0.0
    %242 = vmatpush.msra.mxu0 0.0
    %243 = vmatpush.msra.mxu0 0.0
    %244 = vmatpush.msra.mxu0 0.0
    %245 = vmatpush.msra.mxu0 0.0
    %246 = vmatpush.msra.mxu0 0.0
    %247 = vmatpush.msra.mxu0 0.0
    %248 = vmatpush.msra.mxu0 0.0
    %249 = vmatpush.msra.mxu0 0.0
    %250 = vmatpush.msra.mxu0 0.0
    %251 = vmatpush.msra.mxu0 %v186
    %252 = vmatpush.msra.mxu0 %v185
    %253 = vmatpush.msra.mxu0 %v184
    %254 = vmatpush.msra.mxu0 %v183
    %255 = vmatmul.f32.gmra.mxu0 %v192
    %v256 = vpop.f32.mrf.mxu0
    %v257 = vadd.f32 %v189, %v256
    %258 = vmatmul.f32.gmra.mxu0 %v195
    %v259 = vpop.f32.mrf.mxu0
    %v260 = vadd.f32 %v189, %v259
    %261 = vmatmul.f32.gmra.mxu0 %v198
    %v262 = vpop.f32.mrf.mxu0
    %v263 = vadd.f32 %v189, %v262
    %264 = vmatmul.f32.gmra.mxu0 %v201
    %v265 = vpop.f32.mrf.mxu0
    %v266 = vadd.f32 %v189, %v265
    %267 = vmatmul.f32.gmra.mxu0 %v204
    %v268 = vpop.f32.mrf.mxu0
    %v269 = vadd.f32 %v189, %v268
    %270 = vmatmul.f32.gmra.mxu0 %v207
    %v271 = vpop.f32.mrf.mxu0
    %v272 = vadd.f32 %v189, %v271
    %273 = vmatmul.f32.gmra.mxu0 %v210
    %v274 = vpop.f32.mrf.mxu0
    %v275 = vadd.f32 %v189, %v274
    %276 = vmatmul.f32.gmra.mxu0 %v213
    %v277 = vpop.f32.mrf.mxu0
    %v278 = vadd.f32 %v189, %v277
    %279 = vmatmul.f32.gmra.mxu0 %v216
    %v280 = vpop.f32.mrf.mxu0
    %v281 = vadd.f32 %v189, %v280
    %282 = vmatmul.f32.gmra.mxu0 %v219
    %v283 = vpop.f32.mrf.mxu0
    %v284 = vadd.f32 %v189, %v283
    %285 = vmatmul.f32.gmra.mxu0 %v222
    %v286 = vpop.f32.mrf.mxu0
    %v287 = vadd.f32 %v189, %v286
    %288 = vmatmul.f32.gmra.mxu0 %v225
    %v289 = vpop.f32.mrf.mxu0
    %v290 = vadd.f32 %v189, %v289
    %291 = vmatmul.f32.gmra.mxu0 %v228
    %v292 = vpop.f32.mrf.mxu0
    %v293 = vadd.f32 %v189, %v292
    %294 = vmatmul.f32.gmra.mxu0 %v231
    %v295 = vpop.f32.mrf.mxu0
    %v296 = vadd.f32 %v189, %v295
    %297 = vmatmul.f32.gmra.mxu0 %v234
    %v298 = vpop.f32.mrf.mxu0
    %v299 = vadd.f32 %v189, %v298
    %300 = vmatmul.f32.gmra.mxu0 %v237
    %v301 = vpop.f32.mrf.mxu0
    %v302 = vadd.f32 %v189, %v301
    %303 = vdwg.mxu0
    %v304 = vmax.f32 %v257, 0.0
    %v305 = vmax.f32 %v260, 0.0
    %v306 = vmax.f32 %v263, 0.0
    %v307 = vmax.f32 %v266, 0.0
    %v308 = vmax.f32 %v269, 0.0
    %v309 = vmax.f32 %v272, 0.0
    %v310 = vmax.f32 %v275, 0.0
    %v311 = vmax.f32 %v278, 0.0
    %v312 = vmax.f32 %v281, 0.0
    %v313 = vmax.f32 %v284, 0.0
    %v314 = vmax.f32 %v287, 0.0
    %v315 = vmax.f32 %v290, 0.0
    %v316 = vmax.f32 %v293, 0.0
    %v317 = vmax.f32 %v296, 0.0
    %v318 = vmax.f32 %v299, 0.0
    %v319 = vmax.f32 %v302, 0.0
    %v320 = vld [vmem:[%s5] sm:$0x1]
    %v321 = vld [vmem:[#allocation2] sm:$0x1]
    %323 = vset.pattern.permute.xlu0 0
    %324 = vperm.xlu0 %323, %v321
    %v325 = vpop.permute.xlu0 %324
    %v327 = vperm.slane %v325, 0
    %vm328 = vcmask 130048
    %v330 = vsel %vm328, %v320, 0
    %v333 = vsel %vm328, %v304, 0
    %v336 = vsel %vm328, %v305, 0
    %v339 = vsel %vm328, %v306, 0
    %v342 = vsel %vm328, %v307, 0
    %v345 = vsel %vm328, %v308, 0
    %v348 = vsel %vm328, %v309, 0
    %v351 = vsel %vm328, %v310, 0
    %v354 = vsel %vm328, %v311, 0
    %v357 = vsel %vm328, %v312, 0
    %v360 = vsel %vm328, %v313, 0
    %v363 = vsel %vm328, %v314, 0
    %v366 = vsel %vm328, %v315, 0
    %v369 = vsel %vm328, %v316, 0
    %v372 = vsel %vm328, %v317, 0
    %v375 = vsel %vm328, %v318, 0
    %v378 = vsel %vm328, %v319, 0
    %380 = vmatpush.xpose.msra.mxu0 %v378
    %381 = vmatpush.xpose.msra.mxu0 %v375
    %382 = vmatpush.xpose.msra.mxu0 %v372
    %383 = vmatpush.xpose.msra.mxu0 %v369
    %384 = vmatpush.xpose.msra.mxu0 %v366
    %385 = vmatpush.xpose.msra.mxu0 %v363
    %386 = vmatpush.xpose.msra.mxu0 %v360
    %387 = vmatpush.xpose.msra.mxu0 %v357
    %388 = vmatpush.xpose.msra.mxu0 %v354
    %389 = vmatpush.xpose.msra.mxu0 %v351
    %390 = vmatpush.xpose.msra.mxu0 %v348
    %391 = vmatpush.xpose.msra.mxu0 %v345
    %392 = vmatpush.xpose.msra.mxu0 %v342
    %393 = vmatpush.xpose.msra.mxu0 %v339
    %394 = vmatpush.xpose.msra.mxu0 %v336
    %395 = vmatpush.xpose.msra.mxu0 %v333
    %396 = vmatmul.f32.gmra.mxu0 %v330
    %v397 = vpop.f32.mrf.mxu0
    %v398 = vadd.f32 %v327, %v397
    %399 = vdwg.mxu0
    %400 = vst [vmem:[#allocation3] sm:$0x1] %v398
    // Predicated region
    $region30: #{tpu_custom_call.1} parent=1 // pred_check
      _
    $region31: #{tpu_custom_call.1} parent=1 // pred_check_branch
      %402 = sbr.rel (0) target = $region33
    $region32: #{tpu_custom_call.1} parent=1 // pred_region
      %404 = vsyncadd [#allocation4], 0
      %s406 = sshll.u32 [#allocation3], 4
      %s407 = int_to_ptr.vmem [resolvable:$true] %s406
      %s408 = sshll.u32 %s7, 4
      %s409 = int_to_ptr.hbm [resolvable:$true] %s408
      %411 = dma.vmem_to_hbm [thread:$0]  %s407, 16, %s409, [#allocation4]
    $region33: #{tpu_custom_call.1} parent=1 // pred_fallthru
      _
    // Predicated region
    $region34: #{tpu_custom_call.1} parent=1 // pred_check
      _
    $region35: #{tpu_custom_call.1} parent=1 // pred_check_branch
      %413 = sbr.rel (0) target = $region37
    $region36: #{tpu_custom_call.1} parent=1 // pred_region
      %415 = dma.done [#allocation4], 16
    $region37: #{tpu_custom_call.1} parent=1 // pred_fallthru
      _
    %416 = vsyncpa [#allocation4], 1

</llo_original>
